<compile_context>
chip_gen: v6e
topology: v6e:2x2x1
jax: 0.10.0
libtpu: 0.0.40
codegen_flags: <defaults>
</compile_context>

<pallas_src>
import functools

import jax
import jax.numpy as jnp
from jax.experimental import pallas as pl
from jax.experimental.pallas import tpu as pltpu


HIDDEN = 7  # fixed by the module definition


def _round_up(n: int, m: int) -> int:
    return ((n + m - 1) // m) * m


def _block_diag(w, pack: int):
    """[k, n] -> block-diagonal [k*pack, n*pack] (pack copies of w)."""
    if pack == 1:
        return w
    k, n = w.shape
    eye = jnp.eye(pack, dtype=w.dtype)
    return jnp.einsum("ij,ab->iajb", eye, w).reshape(pack * k, pack * n)


def _tile_bias(b, pack: int):
    b = jnp.asarray(b, jnp.float32).reshape(1, -1)
    return jnp.tile(b, (1, pack)) if pack > 1 else b


def _mlp_kernel(x_ref, w1_ref, w2_ref, w3_ref, b1_ref, b2_ref, b3_ref, o_ref,
                *, lowp):
    """Whole forward (3 matmuls + 2 tanh + bias adds) on one batch tile.

    Rows are independent, so with row-packing each packed row's math is
    exactly y = tanh(tanh(x@W1+b1)@W2+b2)@W3+b3 for its `pack` original rows.
    Accumulation, bias add and tanh always run in f32 (no bf16 VPU/EUP on
    v5e). If bit-faithful f32 matmuls vs. the reference ever matter, the three
    dots can take precision=jax.lax.Precision.HIGHEST at negligible cost
    (compute is never the binding slot here).
    """
    x = x_ref[...]
    h = jnp.dot(x, w1_ref[...], preferred_element_type=jnp.float32) + b1_ref[...]
    h = jnp.tanh(h)
    if lowp:  # bf16-input mode: bf16 MXU operands, f32 accumulation.
        h = h.astype(jnp.bfloat16)
    h = jnp.dot(h, w2_ref[...], preferred_element_type=jnp.float32) + b2_ref[...]
    h = jnp.tanh(h)
    if lowp:
        h = h.astype(jnp.bfloat16)
    out = jnp.dot(h, w3_ref[...], preferred_element_type=jnp.float32) + b3_ref[...]
    o_ref[...] = out.astype(o_ref.dtype)


def soccer_agent_forward(x, params, *, block_b=32768, pack_max=8):
    """SoccerAgentModel MLP forward as a single Pallas TPU kernel.

    x: [B, obs_dim] float32 or bfloat16 (compute precision follows x.dtype; no
    wrapper-side cast is ever inserted, so the dominant x stream reaches the
    kernel untouched). params: w1 [obs_dim,7], b1 [1,7], w2 [7,7], b2 [1,7],
    w3 [7,out_dim], b3 [1,out_dim]. Returns [B, out_dim] float32.
    """
    if x.dtype not in (jnp.float32, jnp.bfloat16):
        x = x.astype(jnp.float32)
    B, obs_dim = x.shape
    hidden = params["w1"].shape[1]
    out_dim = params["w3"].shape[1]

    # --- Row packing ---------------------------------------------------------
    # Largest of {8, 4, 2} that divides B (8 matches K=256 on the v6e/v7x MXU;
    # odd batches fall back to pack=1, which is the plain batch-major layout).
    pack = 1
    for cand in (8, 4, 2):
        if cand <= pack_max and B % cand == 0:
            pack = cand
            break
    Bg = B // pack
    in_w, hid_w, out_w = obs_dim * pack, hidden * pack, out_dim * pack

    lowp = x.dtype == jnp.bfloat16
    w_dtype = jnp.bfloat16 if lowp else jnp.float32
    x_p = x.reshape(Bg, in_w)                       # free row-major reshape
    w1 = _block_diag(params["w1"].astype(w_dtype), pack)
    w2 = _block_diag(params["w2"].astype(w_dtype), pack)
    w3 = _block_diag(params["w3"].astype(w_dtype), pack)
    b1 = _tile_bias(params["b1"], pack)
    b2 = _tile_bias(params["b2"], pack)
    b3 = _tile_bias(params["b3"], pack)

    # --- VMEM budget (generation-aware) ---------------------------------------
    try:
        vmem_cap = int(pltpu.get_tpu_info().vmem_capacity_bytes)
    except Exception:
        vmem_cap = 64 << 20                          # conservative (v7x per-TC)
    # ~70% of physical VMEM: <=48 MiB on v7x, ~90 MiB on v5e/v6e (128 MiB),
    # well past the 16/32 MiB scoped defaults.
    budget = max(32 << 20, min(int(0.70 * vmem_cap), 96 << 20))

    # Per packed-row VMEM cost of one grid step: double-buffered x block +
    # double-buffered out block + the lane-padded intermediates (h1, h2 and
    # the MXU dot results all pad to a multiple of 128 lanes in VMEM).
    lanes = lambda n: _round_up(n, 128)
    itemsize_x = jnp.dtype(x.dtype).itemsize
    per_row = (2 * lanes(in_w) * itemsize_x          # x, 2 buffers
               + 2 * lanes(out_w) * 4                # out, 2 buffers
               + 6 * lanes(max(hid_w, out_w)) * 4)   # h1/h2/dot temporaries
    fixed = 4 << 20                                  # weights/bias + scratch

    # --- Batch-tile selection --------------------------------------------------
    # Big tiles amortize the ~0.35us fixed cost per grid step; block_b
    # (original rows) targets multi-MiB x DMAs per step and the VMEM budget
    # clamps it.
    r = min(block_b // pack, (budget - fixed) // per_row)
    r = max(8, (r // 8) * 8)

    # Prefer >= 8 grid steps when the batch allows (>= 4 per TC on v7x so both
    # cores get overlapped DMA/compute), but never shrink a step below
    # ~512 KiB of x, where per-step overhead would reappear.
    MIN_STEPS = 8
    min_r = max(8, _round_up(-(-(512 * 1024) // (in_w * itemsize_x)), 8))
    if Bg > r and pl.cdiv(Bg, r) < MIN_STEPS:
        r_shrunk = max(8, _round_up(pl.cdiv(Bg, MIN_STEPS), 8))
        if r_shrunk >= min_r:
            r = r_shrunk

    if Bg <= r:
        r = Bg           # single full-extent block (exempt from the 8-row rule)
    grid = (pl.cdiv(Bg, r),)
    # No jnp.pad / output slice: if r does not divide Bg the last block is
    # partial -- out-of-range rows read garbage, but rows are independent (no
    # cross-row reduction) and their stores are masked.

    def _full(a):
        nd = a.ndim
        def idx(i):
            return (0,) * nd
        return pl.BlockSpec(a.shape, idx)

    out = pl.pallas_call(
        functools.partial(_mlp_kernel, lowp=lowp),
        out_shape=jax.ShapeDtypeStruct((Bg, out_w), jnp.float32),
        grid=grid,
        in_specs=[
            pl.BlockSpec((r, in_w), lambda i: (i, 0)),  # x: the only tiled stream
            _full(w1), _full(w2), _full(w3),            # constant index_map ->
            _full(b1), _full(b2), _full(b3),            #   stay resident in VMEM
        ],
        out_specs=pl.BlockSpec((r, out_w), lambda i: (i, 0)),
        compiler_params=pltpu.CompilerParams(
            dimension_semantics=("parallel",),
            vmem_limit_bytes=int(budget),
        ),
    )(x_p, w1, w2, w3, b1, b2, b3)

    return out.reshape(B, out_dim)                   # free row-major reshape


def init_params(key, obs_dim, out_dim=3, hidden=HIDDEN):
    # The PyTorch module zero-inits every Linear (forward would be all zeros);
    # for a meaningful numerical check we use deterministic random params with
    # the same shapes -- the forward math is identical to the module's.
    ks = jax.random.split(key, 6)
    s = 0.1
    return {
        "w1": s * jax.random.normal(ks[0], (obs_dim, hidden), jnp.float32),
        "b1": s * jax.random.normal(ks[1], (1, hidden), jnp.float32),
        "w2": s * jax.random.normal(ks[2], (hidden, hidden), jnp.float32),
        "b2": s * jax.random.normal(ks[3], (1, hidden), jnp.float32),
        "w3": s * jax.random.normal(ks[4], (hidden, out_dim), jnp.float32),
        "b3": s * jax.random.normal(ks[5], (1, out_dim), jnp.float32),
    }


def reference_forward(x, p):
    h1 = jnp.tanh(x @ p["w1"] + p["b1"])
    h2 = jnp.tanh(h1 @ p["w2"] + p["b2"])
    return h2 @ p["w3"] + p["b3"]


if __name__ == "__main__":
    key = jax.random.PRNGKey(0)
    k_x, k_p = jax.random.split(key)

    batch, obs_dim, out_dim = 16, 32, 3
    x = jax.random.normal(k_x, (batch, obs_dim), jnp.float32)
    params = init_params(k_p, obs_dim, out_dim)
    ref = reference_forward(x, params)

    # 1) f32, batch divisible by 8 -> pack=8 lane-dense path.
    out = jax.block_until_ready(soccer_agent_forward(x, params))
    assert out.shape == (batch, out_dim)
    assert jnp.allclose(out, ref, atol=2e-2, rtol=2e-2), "f32 packed path mismatch"

    # 2) f32, ragged batch (13) -> pack=1 fallback, single full-extent block.
    out13 = jax.block_until_ready(soccer_agent_forward(x[:13], params))
    assert out13.shape == (13, out_dim)
    assert jnp.allclose(out13, ref[:13], atol=2e-2, rtol=2e-2), "ragged path mismatch"

    # 3) force a multi-step grid with a masked partial last block (no padding).
    out_part = jax.block_until_ready(
        soccer_agent_forward(x[:13], params, block_b=8, pack_max=1))
    assert out_part.shape == (13, out_dim)
    assert jnp.allclose(out_part, ref[:13], atol=2e-2, rtol=2e-2), \
        "partial-block path mismatch"

    # 4) bf16 input path (caller already holds bf16: no wrapper cast, bf16 MXU).
    out_bf = jax.block_until_ready(
        soccer_agent_forward(x.astype(jnp.bfloat16), params))
    assert out_bf.shape == (batch, out_dim)
    assert jnp.allclose(out_bf, ref, atol=5e-2, rtol=5e-2), "bf16 path mismatch"

    print("KERNEL_OK")
</pallas_src>

<mosaic_0001>
module attributes {stable_mosaic.version = 11 : i64} {
  func.func @_mlp_kernel(%arg0: i32, %arg1: memref<2x256xf32, #tpu.memory_space<vmem>>, %arg2: memref<256x56xf32, #tpu.memory_space<vmem>>, %arg3: memref<56x56xf32, #tpu.memory_space<vmem>>, %arg4: memref<56x24xf32, #tpu.memory_space<vmem>>, %arg5: memref<1x56xf32, #tpu.memory_space<vmem>>, %arg6: memref<1x56xf32, #tpu.memory_space<vmem>>, %arg7: memref<1x24xf32, #tpu.memory_space<vmem>>, %arg8: memref<2x24xf32, #tpu.memory_space<vmem>>) attributes {dimension_semantics = [#tpu.dimension_semantics<parallel>], iteration_bounds = array<i64: 1>, scalar_prefetch = 0 : i64, scratch_operands = 0 : i64, tpu.core_type = #tpu.core_type<tc>, window_params = [{transform_indices = @transform_0, window_bounds = array<i64: 2, 256>}, {pipeline_mode = #tpu.pipeline_mode<synchronous>, transform_indices = @transform_1, window_bounds = array<i64: 256, 56>}, {pipeline_mode = #tpu.pipeline_mode<synchronous>, transform_indices = @transform_2, window_bounds = array<i64: 56, 56>}, {pipeline_mode = #tpu.pipeline_mode<synchronous>, transform_indices = @transform_3, window_bounds = array<i64: 56, 24>}, {pipeline_mode = #tpu.pipeline_mode<synchronous>, transform_indices = @transform_4, window_bounds = array<i64: 1, 56>}, {pipeline_mode = #tpu.pipeline_mode<synchronous>, transform_indices = @transform_5, window_bounds = array<i64: 1, 56>}, {pipeline_mode = #tpu.pipeline_mode<synchronous>, transform_indices = @transform_6, window_bounds = array<i64: 1, 24>}, {transform_indices = @transform_7, window_bounds = array<i64: 2, 24>}]} {
    %c0 = arith.constant 0 : index
    %c0_0 = arith.constant 0 : index
    %0 = vector.load %arg1[%c0, %c0_0] : memref<2x256xf32, #tpu.memory_space<vmem>>, vector<2x256xf32>
    %c0_1 = arith.constant 0 : index
    %c0_2 = arith.constant 0 : index
    %1 = vector.load %arg2[%c0_1, %c0_2] : memref<256x56xf32, #tpu.memory_space<vmem>>, vector<256x56xf32>
    %cst = arith.constant dense<0.000000e+00> : vector<2x56xf32>
    %2 = tpu.matmul %0, %1, %cst {dimension_numbers = #tpu.dot_dimension_numbers<[1], [0], [0], [1], [0, 0, 1, 1], [], []>} : vector<2x256xf32>, vector<256x56xf32>, vector<2x56xf32> -> vector<2x56xf32>
    %c0_3 = arith.constant 0 : index
    %c0_4 = arith.constant 0 : index
    %3 = vector.load %arg5[%c0_3, %c0_4] : memref<1x56xf32, #tpu.memory_space<vmem>>, vector<1x56xf32>
    %4 = vector.broadcast %3 : vector<1x56xf32> to vector<2x56xf32>
    %5 = arith.addf %2, %4 : vector<2x56xf32>
    %6 = math.tanh %5 : vector<2x56xf32>
    %c0_5 = arith.constant 0 : index
    %c0_6 = arith.constant 0 : index
    %7 = vector.load %arg3[%c0_5, %c0_6] : memref<56x56xf32, #tpu.memory_space<vmem>>, vector<56x56xf32>
    %cst_7 = arith.constant dense<0.000000e+00> : vector<2x56xf32>
    %8 = tpu.matmul %6, %7, %cst_7 {dimension_numbers = #tpu.dot_dimension_numbers<[1], [0], [0], [1], [0, 0, 1, 1], [], []>} : vector<2x56xf32>, vector<56x56xf32>, vector<2x56xf32> -> vector<2x56xf32>
    %c0_8 = arith.constant 0 : index
    %c0_9 = arith.constant 0 : index
    %9 = vector.load %arg6[%c0_8, %c0_9] : memref<1x56xf32, #tpu.memory_space<vmem>>, vector<1x56xf32>
    %10 = vector.broadcast %9 : vector<1x56xf32> to vector<2x56xf32>
    %11 = arith.addf %8, %10 : vector<2x56xf32>
    %12 = math.tanh %11 : vector<2x56xf32>
    %c0_10 = arith.constant 0 : index
    %c0_11 = arith.constant 0 : index
    %13 = vector.load %arg4[%c0_10, %c0_11] : memref<56x24xf32, #tpu.memory_space<vmem>>, vector<56x24xf32>
    %cst_12 = arith.constant dense<0.000000e+00> : vector<2x24xf32>
    %14 = tpu.matmul %12, %13, %cst_12 {dimension_numbers = #tpu.dot_dimension_numbers<[1], [0], [0], [1], [0, 0, 1, 1], [], []>} : vector<2x56xf32>, vector<56x24xf32>, vector<2x24xf32> -> vector<2x24xf32>
    %c0_13 = arith.constant 0 : index
    %c0_14 = arith.constant 0 : index
    %15 = vector.load %arg7[%c0_13, %c0_14] : memref<1x24xf32, #tpu.memory_space<vmem>>, vector<1x24xf32>
    %16 = vector.broadcast %15 : vector<1x24xf32> to vector<2x24xf32>
    %17 = arith.addf %14, %16 : vector<2x24xf32>
    %c0_15 = arith.constant 0 : index
    %c0_16 = arith.constant 0 : index
    %18 = vector.load %arg8[%c0_15, %c0_16] : memref<2x24xf32, #tpu.memory_space<vmem>>, vector<2x24xf32>
    tpu.vector_store %arg8[%c0_15, %c0_16], %17 {strides = array<i32>} : memref<2x24xf32, #tpu.memory_space<vmem>>, vector<2x24xf32>,
    return
  }
  func.func @transform_0(%arg0: i32) -> (i32, i32) {
    %c0_i32 = arith.constant 0 : i32
    %c0_i32_0 = arith.constant 0 : i32
    return %arg0, %c0_i32 : i32, i32
  }
  func.func @transform_1(%arg0: i32) -> (i32, i32) {
    %c0_i32 = arith.constant 0 : i32
    %c0_i32_0 = arith.constant 0 : i32
    %c0_i32_1 = arith.constant 0 : i32
    return %c0_i32, %c0_i32_0 : i32, i32
  }
  func.func @transform_2(%arg0: i32) -> (i32, i32) {
    %c0_i32 = arith.constant 0 : i32
    %c0_i32_0 = arith.constant 0 : i32
    %c0_i32_1 = arith.constant 0 : i32
    return %c0_i32, %c0_i32_0 : i32, i32
  }
  func.func @transform_3(%arg0: i32) -> (i32, i32) {
    %c0_i32 = arith.constant 0 : i32
    %c0_i32_0 = arith.constant 0 : i32
    %c0_i32_1 = arith.constant 0 : i32
    return %c0_i32, %c0_i32_0 : i32, i32
  }
  func.func @transform_4(%arg0: i32) -> (i32, i32) {
    %c0_i32 = arith.constant 0 : i32
    %c0_i32_0 = arith.constant 0 : i32
    %c0_i32_1 = arith.constant 0 : i32
    return %c0_i32, %c0_i32_0 : i32, i32
  }
  func.func @transform_5(%arg0: i32) -> (i32, i32) {
    %c0_i32 = arith.constant 0 : i32
    %c0_i32_0 = arith.constant 0 : i32
    %c0_i32_1 = arith.constant 0 : i32
    return %c0_i32, %c0_i32_0 : i32, i32
  }
  func.func @transform_6(%arg0: i32) -> (i32, i32) {
    %c0_i32 = arith.constant 0 : i32
    %c0_i32_0 = arith.constant 0 : i32
    %c0_i32_1 = arith.constant 0 : i32
    return %c0_i32, %c0_i32_0 : i32, i32
  }
  func.func @transform_7(%arg0: i32) -> (i32, i32) {
    %c0_i32 = arith.constant 0 : i32
    %c0_i32_0 = arith.constant 0 : i32
    return %arg0, %c0_i32 : i32, i32
  }
}

</mosaic_0001>

<llo_original>
// kernel: tpu_custom_call.1
$region0: #{tpu_custom_call.1}
  #allocation0 [shape = 'u32[]', space=smem, size = 0x4, offset = 0x4, fixed_abs, tag = 'smem constant byte address 0x4 - core index']
  #allocation1 [shape = 'u32[144,128]{1,0:T(1,128)}', space=vmem, size = 0x12000, scoped, tag = 'internal scratch']
  %s0 = inlined_call_operand.vmem [shape: f32[2,256], index: 0, kind: input, shape index: {}]
  %s1 = inlined_call_operand.vmem [shape: f32[256,56], index: 1, kind: input, shape index: {}]
  %s2 = inlined_call_operand.vmem [shape: f32[56,56], index: 2, kind: input, shape index: {}]
  %s3 = inlined_call_operand.vmem [shape: f32[56,24], index: 3, kind: input, shape index: {}]
  %s4 = inlined_call_operand.vmem [shape: f32[1,56], index: 4, kind: input, shape index: {}]
  %s5 = inlined_call_operand.vmem [shape: f32[1,56], index: 5, kind: input, shape index: {}]
  %s6 = inlined_call_operand.vmem [shape: f32[1,24], index: 6, kind: input, shape index: {}]
  %s7 = inlined_call_operand.hbm [shape: f32[2,24], index: 7, kind: output, shape index: {}]
  %s8 = sld [smem:[#allocation0]]
  $region38: #{tpu_custom_call.1} parent=0
    _
  %s10 = ssub.s32 1, %s8
  %s11 = scalar_select 0, %s10, %s8
  $region1: #{tpu_custom_call.1} parent=0
    #allocation2 [shape = 'u8[1024]{0}', space=vmem, size = 0x400, scoped, tag = 'output window, operand 0, single buffered']
    #allocation3 [shape = 's32[1]{0}', space=sflag, size = 0x4, scoped, tag = 'scoped memory for tpu_custom_call.1']
    %12 = vsyncpa [#allocation3], 0
    // Predicated region
    $region2: #{tpu_custom_call.1} parent=1 // pred_check
      _
    $region3: #{tpu_custom_call.1} parent=1 // pred_check_branch
      %14 = sbr.rel (0) target = $region5
    $region4: #{tpu_custom_call.1} parent=1 // pred_region
      _
    $region5: #{tpu_custom_call.1} parent=1 // pred_fallthru
      _
    // Predicated region
    $region6: #{tpu_custom_call.1} parent=1 // pred_check
      _
    $region7: #{tpu_custom_call.1} parent=1 // pred_check_branch
      %16 = sbr.rel (0) target = $region9
    $region8: #{tpu_custom_call.1} parent=1 // pred_region
      _
    $region9: #{tpu_custom_call.1} parent=1 // pred_fallthru
      _
    // Predicated region
    $region10: #{tpu_custom_call.1} parent=1 // pred_check
      _
    $region11: #{tpu_custom_call.1} parent=1 // pred_check_branch
      %18 = sbr.rel (0) target = $region13
    $region12: #{tpu_custom_call.1} parent=1 // pred_region
      _
    $region13: #{tpu_custom_call.1} parent=1 // pred_fallthru
      _
    // Predicated region
    $region14: #{tpu_custom_call.1} parent=1 // pred_check
      _
    $region15: #{tpu_custom_call.1} parent=1 // pred_check_branch
      %20 = sbr.rel (0) target = $region17
    $region16: #{tpu_custom_call.1} parent=1 // pred_region
      _
    $region17: #{tpu_custom_call.1} parent=1 // pred_fallthru
      _
    // Predicated region
    $region18: #{tpu_custom_call.1} parent=1 // pred_check
      _
    $region19: #{tpu_custom_call.1} parent=1 // pred_check_branch
      %22 = sbr.rel (0) target = $region21
    $region20: #{tpu_custom_call.1} parent=1 // pred_region
      _
    $region21: #{tpu_custom_call.1} parent=1 // pred_fallthru
      _
    // Predicated region
    $region22: #{tpu_custom_call.1} parent=1 // pred_check
      _
    $region23: #{tpu_custom_call.1} parent=1 // pred_check_branch
      %24 = sbr.rel (0) target = $region25
    $region24: #{tpu_custom_call.1} parent=1 // pred_region
      _
    $region25: #{tpu_custom_call.1} parent=1 // pred_fallthru
      _
    // Predicated region
    $region26: #{tpu_custom_call.1} parent=1 // pred_check
      _
    $region27: #{tpu_custom_call.1} parent=1 // pred_check_branch
      %26 = sbr.rel (0) target = $region29
    $region28: #{tpu_custom_call.1} parent=1 // pred_region
      _
    $region29: #{tpu_custom_call.1} parent=1 // pred_fallthru
      _
    %v27 = vld [vmem:[%s0] sm:$0xf]
    %v28 = vld [vmem:[%s1] sm:$0xff]
    %v29 = vld [vmem:[%s1 + $0x8] sm:$0xff]
    %v30 = vld [vmem:[%s1 + $0x10] sm:$0xff]
    %v31 = vld [vmem:[%s1 + $0x18] sm:$0xff]
    %v32 = vld [vmem:[%s1 + $0x20] sm:$0xff]
    %v33 = vld [vmem:[%s1 + $0x28] sm:$0xff]
    %v34 = vld [vmem:[%s1 + $0x30] sm:$0xff]
    %v35 = vld [vmem:[%s1 + $0x38] sm:$0xff]
    %v36 = vld [vmem:[%s1 + $0x40] sm:$0xff]
    %v37 = vld [vmem:[%s1 + $0x48] sm:$0xff]
    %v38 = vld [vmem:[%s1 + $0x50] sm:$0xff]
    %v39 = vld [vmem:[%s1 + $0x58] sm:$0xff]
    %v40 = vld [vmem:[%s1 + $0x60] sm:$0xff]
    %v41 = vld [vmem:[%s1 + $0x68] sm:$0xff]
    %v42 = vld [vmem:[%s1 + $0x70] sm:$0xff]
    %v43 = vld [vmem:[%s1 + $0x78] sm:$0xff]
    %v44 = vld [vmem:[%s1 + $0x80] sm:$0xff]
    %v45 = vld [vmem:[%s1 + $0x88] sm:$0xff]
    %v46 = vld [vmem:[%s1 + $0x90] sm:$0xff]
    %v47 = vld [vmem:[%s1 + $0x98] sm:$0xff]
    %v48 = vld [vmem:[%s1 + $0xa0] sm:$0xff]
    %v49 = vld [vmem:[%s1 + $0xa8] sm:$0xff]
    %v50 = vld [vmem:[%s1 + $0xb0] sm:$0xff]
    %v51 = vld [vmem:[%s1 + $0xb8] sm:$0xff]
    %v52 = vld [vmem:[%s1 + $0xc0] sm:$0xff]
    %v53 = vld [vmem:[%s1 + $0xc8] sm:$0xff]
    %v54 = vld [vmem:[%s1 + $0xd0] sm:$0xff]
    %v55 = vld [vmem:[%s1 + $0xd8] sm:$0xff]
    %v56 = vld [vmem:[%s1 + $0xe0] sm:$0xff]
    %v57 = vld [vmem:[%s1 + $0xe8] sm:$0xff]
    %v58 = vld [vmem:[%s1 + $0xf0] sm:$0xff]
    %v59 = vld [vmem:[%s1 + $0xf8] sm:$0xff]
    %v60 = vld [vmem:[%s4] sm:$0x1]
    %v62 = vlaneseq
    %v63 = vshrl.u32 %v62, 7
    %v64 = vsub.s32 0, %v63
    %v65 = vrot.slane %v60, %v64
    %v69 = vunpack.c.l.s4 1983009808
    %v70 = vunpack.c.0.s8 %v69
    %v71 = vlaneseq
    %v72 = vshrl.u32 %v71, 7
    %v73 = vsub.s32 %v70, %v72
    %v74 = vrot.slane %v27, %v73
    %v75 = vcombine.high %v74, %v74
    %78 = vmatprep.subr.mxu0 0.0
    %79 = vmatpush1.msra.mxu0 %v43
    %80 = vmatprep.subr.mxu0 0.0
    %81 = vmatpush1.msra.mxu0 %v42
    %82 = vmatprep.subr.mxu0 0.0
    %83 = vmatpush1.msra.mxu0 %v41
    %84 = vmatprep.subr.mxu0 0.0
    %85 = vmatpush1.msra.mxu0 %v40
    %86 = vmatprep.subr.mxu0 0.0
    %87 = vmatpush1.msra.mxu0 %v39
    %88 = vmatprep.subr.mxu0 0.0
    %89 = vmatpush1.msra.mxu0 %v38
    %90 = vmatprep.subr.mxu0 0.0
    %91 = vmatpush1.msra.mxu0 %v37
    %92 = vmatprep.subr.mxu0 0.0
    %93 = vmatpush1.msra.mxu0 %v36
    %94 = vmatprep.subr.mxu0 0.0
    %95 = vmatpush1.msra.mxu0 %v35
    %96 = vmatprep.subr.mxu0 0.0
    %97 = vmatpush1.msra.mxu0 %v34
    %98 = vmatprep.subr.mxu0 0.0
    %99 = vmatpush1.msra.mxu0 %v33
    %100 = vmatprep.subr.mxu0 0.0
    %101 = vmatpush1.msra.mxu0 %v32
    %102 = vmatprep.subr.mxu0 0.0
    %103 = vmatpush1.msra.mxu0 %v31
    %104 = vmatprep.subr.mxu0 0.0
    %105 = vmatpush1.msra.mxu0 %v30
    %106 = vmatprep.subr.mxu0 0.0
    %107 = vmatpush1.msra.mxu0 %v29
    %108 = vmatprep.subr.mxu0 0.0
    %109 = vmatpush1.msra.mxu0 %v28
    %110 = vmatprep.subr.mxu0 0.0
    %111 = vmatpush2.msra.mxu0 %v59
    %112 = vmatprep.subr.mxu0 0.0
    %113 = vmatpush2.msra.mxu0 %v58
    %114 = vmatprep.subr.mxu0 0.0
    %115 = vmatpush2.msra.mxu0 %v57
    %116 = vmatprep.subr.mxu0 0.0
    %117 = vmatpush2.msra.mxu0 %v56
    %118 = vmatprep.subr.mxu0 0.0
    %119 = vmatpush2.msra.mxu0 %v55
    %120 = vmatprep.subr.mxu0 0.0
    %121 = vmatpush2.msra.mxu0 %v54
    %122 = vmatprep.subr.mxu0 0.0
    %123 = vmatpush2.msra.mxu0 %v53
    %124 = vmatprep.subr.mxu0 0.0
    %125 = vmatpush2.msra.mxu0 %v52
    %126 = vmatprep.subr.mxu0 0.0
    %127 = vmatpush2.msra.mxu0 %v51
    %128 = vmatprep.subr.mxu0 0.0
    %129 = vmatpush2.msra.mxu0 %v50
    %130 = vmatprep.subr.mxu0 0.0
    %131 = vmatpush2.msra.mxu0 %v49
    %132 = vmatprep.subr.mxu0 0.0
    %133 = vmatpush2.msra.mxu0 %v48
    %134 = vmatprep.subr.mxu0 0.0
    %135 = vmatpush2.msra.mxu0 %v47
    %136 = vmatprep.subr.mxu0 0.0
    %137 = vmatpush2.msra.mxu0 %v46
    %138 = vmatprep.subr.mxu0 0.0
    %139 = vmatpush2.msra.mxu0 %v45
    %140 = vmatprep.subr.mxu0 0.0
    %141 = vmatpush2.msra.mxu0 %v44
    %142 = vmatprep.mubr.f32.mxu0 %v75
    %143 = vmatmul.mubr.f32.gmra.mxu0 %v74
    %v144 = vpop.f32.mrf.mxu0
    %v145 = vadd.f32 %v65, %v144
    %v146 = vpop.f32.mrf.mxu0
    %147 = vdwg.mxu0
    %v148 = vtanh.pop %v145
    %v149 = vld [vmem:[%s2] sm:$0xff]
    %v150 = vld [vmem:[%s2 + $0x8] sm:$0xff]
    %v151 = vld [vmem:[%s2 + $0x10] sm:$0xff]
    %v152 = vld [vmem:[%s2 + $0x18] sm:$0xff]
    %v153 = vld [vmem:[%s2 + $0x20] sm:$0xff]
    %v154 = vld [vmem:[%s2 + $0x28] sm:$0xff]
    %v155 = vld [vmem:[%s2 + $0x30] sm:$0xff]
    %v156 = vld [vmem:[%s5] sm:$0x1]
    %v158 = vlaneseq
    %v159 = vshrl.u32 %v158, 7
    %v160 = vsub.s32 0, %v159
    %v161 = vrot.slane %v156, %v160
    %vm163 = vcmask 457728
    %v165 = vsel %vm163, %v148, 0
    %167 = vmatprep.subr.mxu0 0.0
    %168 = vmatpush1.msra.mxu0 0.0
    %169 = vmatprep.subr.mxu0 0.0
    %170 = vmatpush1.msra.mxu0 0.0
    %171 = vmatprep.subr.mxu0 0.0
    %172 = vmatpush1.msra.mxu0 0.0
    %173 = vmatprep.subr.mxu0 0.0
    %174 = vmatpush1.msra.mxu0 0.0
    %175 = vmatprep.subr.mxu0 0.0
    %176 = vmatpush1.msra.mxu0 0.0
    %177 = vmatprep.subr.mxu0 0.0
    %178 = vmatpush1.msra.mxu0 0.0
    %179 = vmatprep.subr.mxu0 0.0
    %180 = vmatpush1.msra.mxu0 0.0
    %181 = vmatprep.subr.mxu0 0.0
    %182 = vmatpush1.msra.mxu0 0.0
    %183 = vmatprep.subr.mxu0 0.0
    %184 = vmatpush1.msra.mxu0 0.0
    %185 = vmatprep.subr.mxu0 0.0
    %186 = vmatpush1.msra.mxu0 %v155
    %187 = vmatprep.subr.mxu0 0.0
    %188 = vmatpush1.msra.mxu0 %v154
    %189 = vmatprep.subr.mxu0 0.0
    %190 = vmatpush1.msra.mxu0 %v153
    %191 = vmatprep.subr.mxu0 0.0
    %192 = vmatpush1.msra.mxu0 %v152
    %193 = vmatprep.subr.mxu0 0.0
    %194 = vmatpush1.msra.mxu0 %v151
    %195 = vmatprep.subr.mxu0 0.0
    %196 = vmatpush1.msra.mxu0 %v150
    %197 = vmatprep.subr.mxu0 0.0
    %198 = vmatpush1.msra.mxu0 %v149
    %199 = vmatprep.subr.mxu0 0.0
    %200 = vmatpush2.msra.mxu0 0.0
    %201 = vmatprep.subr.mxu0 0.0
    %202 = vmatpush2.msra.mxu0 0.0
    %203 = vmatprep.subr.mxu0 0.0
    %204 = vmatpush2.msra.mxu0 0.0
    %205 = vmatprep.subr.mxu0 0.0
    %206 = vmatpush2.msra.mxu0 0.0
    %207 = vmatprep.subr.mxu0 0.0
    %208 = vmatpush2.msra.mxu0 0.0
    %209 = vmatprep.subr.mxu0 0.0
    %210 = vmatpush2.msra.mxu0 0.0
    %211 = vmatprep.subr.mxu0 0.0
    %212 = vmatpush2.msra.mxu0 0.0
    %213 = vmatprep.subr.mxu0 0.0
    %214 = vmatpush2.msra.mxu0 0.0
    %215 = vmatprep.subr.mxu0 0.0
    %216 = vmatpush2.msra.mxu0 0.0
    %217 = vmatprep.subr.mxu0 0.0
    %218 = vmatpush2.msra.mxu0 0.0
    %219 = vmatprep.subr.mxu0 0.0
    %220 = vmatpush2.msra.mxu0 0.0
    %221 = vmatprep.subr.mxu0 0.0
    %222 = vmatpush2.msra.mxu0 0.0
    %223 = vmatprep.subr.mxu0 0.0
    %224 = vmatpush2.msra.mxu0 0.0
    %225 = vmatprep.subr.mxu0 0.0
    %226 = vmatpush2.msra.mxu0 0.0
    %227 = vmatprep.subr.mxu0 0.0
    %228 = vmatpush2.msra.mxu0 0.0
    %229 = vmatprep.subr.mxu0 0.0
    %230 = vmatpush2.msra.mxu0 0.0
    %231 = vmatprep.mubr.f32.mxu0 0.0
    %232 = vmatmul.mubr.f32.gmra.mxu0 %v165
    %v233 = vpop.f32.mrf.mxu0
    %v234 = vadd.f32 %v161, %v233
    %v235 = vpop.f32.mrf.mxu0
    %236 = vdwg.mxu0
    %v237 = vtanh.pop %v234
    %v238 = vld [vmem:[%s3] sm:$0xff]
    %v239 = vld [vmem:[%s3 + $0x8] sm:$0xff]
    %v240 = vld [vmem:[%s3 + $0x10] sm:$0xff]
    %v241 = vld [vmem:[%s3 + $0x18] sm:$0xff]
    %v242 = vld [vmem:[%s3 + $0x20] sm:$0xff]
    %v243 = vld [vmem:[%s3 + $0x28] sm:$0xff]
    %v244 = vld [vmem:[%s3 + $0x30] sm:$0xff]
    %v245 = vld [vmem:[%s6] sm:$0x1]
    %v247 = vlaneseq
    %v248 = vshrl.u32 %v247, 7
    %v249 = vsub.s32 0, %v248
    %v250 = vrot.slane %v245, %v249
    %v253 = vsel %vm163, %v237, 0
    %255 = vmatprep.subr.mxu0 0.0
    %256 = vmatpush1.msra.mxu0 0.0
    %257 = vmatprep.subr.mxu0 0.0
    %258 = vmatpush1.msra.mxu0 0.0
    %259 = vmatprep.subr.mxu0 0.0
    %260 = vmatpush1.msra.mxu0 0.0
    %261 = vmatprep.subr.mxu0 0.0
    %262 = vmatpush1.msra.mxu0 0.0
    %263 = vmatprep.subr.mxu0 0.0
    %264 = vmatpush1.msra.mxu0 0.0
    %265 = vmatprep.subr.mxu0 0.0
    %266 = vmatpush1.msra.mxu0 0.0
    %267 = vmatprep.subr.mxu0 0.0
    %268 = vmatpush1.msra.mxu0 0.0
    %269 = vmatprep.subr.mxu0 0.0
    %270 = vmatpush1.msra.mxu0 0.0
    %271 = vmatprep.subr.mxu0 0.0
    %272 = vmatpush1.msra.mxu0 0.0
    %273 = vmatprep.subr.mxu0 0.0
    %274 = vmatpush1.msra.mxu0 %v244
    %275 = vmatprep.subr.mxu0 0.0
    %276 = vmatpush1.msra.mxu0 %v243
    %277 = vmatprep.subr.mxu0 0.0
    %278 = vmatpush1.msra.mxu0 %v242
    %279 = vmatprep.subr.mxu0 0.0
    %280 = vmatpush1.msra.mxu0 %v241
    %281 = vmatprep.subr.mxu0 0.0
    %282 = vmatpush1.msra.mxu0 %v240
    %283 = vmatprep.subr.mxu0 0.0
    %284 = vmatpush1.msra.mxu0 %v239
    %285 = vmatprep.subr.mxu0 0.0
    %286 = vmatpush1.msra.mxu0 %v238
    %287 = vmatprep.subr.mxu0 0.0
    %288 = vmatpush2.msra.mxu0 0.0
    %289 = vmatprep.subr.mxu0 0.0
    %290 = vmatpush2.msra.mxu0 0.0
    %291 = vmatprep.subr.mxu0 0.0
    %292 = vmatpush2.msra.mxu0 0.0
    %293 = vmatprep.subr.mxu0 0.0
    %294 = vmatpush2.msra.mxu0 0.0
    %295 = vmatprep.subr.mxu0 0.0
    %296 = vmatpush2.msra.mxu0 0.0
    %297 = vmatprep.subr.mxu0 0.0
    %298 = vmatpush2.msra.mxu0 0.0
    %299 = vmatprep.subr.mxu0 0.0
    %300 = vmatpush2.msra.mxu0 0.0
    %301 = vmatprep.subr.mxu0 0.0
    %302 = vmatpush2.msra.mxu0 0.0
    %303 = vmatprep.subr.mxu0 0.0
    %304 = vmatpush2.msra.mxu0 0.0
    %305 = vmatprep.subr.mxu0 0.0
    %306 = vmatpush2.msra.mxu0 0.0
    %307 = vmatprep.subr.mxu0 0.0
    %308 = vmatpush2.msra.mxu0 0.0
    %309 = vmatprep.subr.mxu0 0.0
    %310 = vmatpush2.msra.mxu0 0.0
    %311 = vmatprep.subr.mxu0 0.0
    %312 = vmatpush2.msra.mxu0 0.0
    %313 = vmatprep.subr.mxu0 0.0
    %314 = vmatpush2.msra.mxu0 0.0
    %315 = vmatprep.subr.mxu0 0.0
    %316 = vmatpush2.msra.mxu0 0.0
    %317 = vmatprep.subr.mxu0 0.0
    %318 = vmatpush2.msra.mxu0 0.0
    %319 = vmatprep.mubr.f32.mxu0 0.0
    %320 = vmatmul.mubr.f32.gmra.mxu0 %v253
    %v321 = vpop.f32.mrf.mxu0
    %v322 = vadd.f32 %v250, %v321
    %v323 = vpop.f32.mrf.mxu0
    %324 = vdwg.mxu0
    %vm325 = vcmask 189440
    %326 = vst.msk [vmem:[#allocation2] sm:$0x3] %vm325, %v322
    // Predicated region
    $region30: #{tpu_custom_call.1} parent=1 // pred_check
      _
    $region31: #{tpu_custom_call.1} parent=1 // pred_check_branch
      %328 = sbr.rel (0) target = $region33
    $region32: #{tpu_custom_call.1} parent=1 // pred_region
      %s330 = ssub.s32 32, 32
      %331 = vsyncadd [#allocation3], %s330
      %s333 = sshll.u32 [#allocation2], 4
      %s334 = int_to_ptr.vmem [resolvable:$true] %s333
      %336 = dma.vmem_to_hbm [thread:$0]  %s334, 32, %s7, [#allocation3]
    $region33: #{tpu_custom_call.1} parent=1 // pred_fallthru
      _
    // Predicated region
    $region34: #{tpu_custom_call.1} parent=1 // pred_check
      _
    $region35: #{tpu_custom_call.1} parent=1 // pred_check_branch
      %338 = sbr.rel (0) target = $region37
    $region36: #{tpu_custom_call.1} parent=1 // pred_region
      %339 = dma.done [#allocation3], 32
    $region37: #{tpu_custom_call.1} parent=1 // pred_fallthru
      _
    %340 = vsyncpa [#allocation3], 1

</llo_original>
